<compile_context>
chip_gen: v7x
topology: tpu7x:2x2x1
jax: 0.10.0
libtpu: 0.0.40
codegen_flags: <defaults>
</compile_context>

<pallas_src>
import functools

import jax
import jax.numpy as jnp
from jax.experimental import pallas as pl
from jax.experimental.pallas import tpu as pltpu

_GELU_C = 0.7978845608028654  # sqrt(2/pi)
_LN_EPS = 1e-5                # PyTorch nn.LayerNorm default


def _cdiv(a, b):
    return (a + b - 1) // b


def _round_up(a, b):
    return _cdiv(a, b) * b


def _gelu_tanh(x):
    # GELU(approximate='tanh') as in PyTorch
    return 0.5 * x * (1.0 + jnp.tanh(_GELU_C * (x + 0.044715 * x * x * x)))


def _layer_norm(x, gamma, beta):
    # plain LayerNorm (used only by the pure-JAX reference)
    mean = jnp.mean(x, axis=-1, keepdims=True)
    var = jnp.mean((x - mean) ** 2, axis=-1, keepdims=True)
    return (x - mean) * jax.lax.rsqrt(var + _LN_EPS) * gamma + beta


def _seg_layer_norm(h, m_seg, inv_h, gamma, beta):
    """Per-ensemble LayerNorm in the packed (B, N*H) lane layout.

    m_seg is a block-diagonal (N*H, N*H) f32 matrix of ones within each
    ensemble's H-lane segment, so h @ m_seg is a segmented lane sum.  Uses
    E[h^2] - mean^2 so both segment-sum matmuls depend only on h (no MXU->VPU->
    MXU serialization on the critical path).
    """
    s1 = jnp.dot(h, m_seg, preferred_element_type=jnp.float32)
    s2 = jnp.dot(h * h, m_seg, preferred_element_type=jnp.float32)
    mean = s1 * inv_h
    var = jnp.maximum(s2 * inv_h - mean * mean, 0.0)
    return (h - mean) * jax.lax.rsqrt(var + _LN_EPS) * gamma + beta


def qfuncs_kernel(obs_ref, act_ref, w1o_ref, w1a_ref, w2_ref, w3_ref, b3_ref,
                  vec_ref, mseg_ref, out_ref, *, hidden_dim):
    inv_h = 1.0 / hidden_dim
    m_seg = mseg_ref[...]                    # (NH, NH) f32, DMA'd once

    # Packed per-ensemble vectors (one (6, N*H) buffer -> 1 DMA).
    b1 = vec_ref[0:1, :]
    g1 = vec_ref[1:2, :]
    be1 = vec_ref[2:3, :]
    b2 = vec_ref[3:4, :]
    g2 = vec_ref[4:5, :]
    be2 = vec_ref[5:6, :]

    obs = obs_ref[...].astype(jnp.bfloat16)                         # (TB, Do)
    act = act_ref[...].astype(jnp.bfloat16)                         # (TB, Da)

    # Layer 1: split packed Linear (obs/act row blocks) -> per-ensemble LN -> GELU
    h = (jnp.dot(obs, w1o_ref[...], preferred_element_type=jnp.float32)
         + jnp.dot(act, w1a_ref[...], preferred_element_type=jnp.float32)
         + b1)
    h = _gelu_tanh(_seg_layer_norm(h, m_seg, inv_h, g1, be1))

    # Layer 2: block-diagonal Linear (bf16 MXU) -> per-ensemble LN -> GELU
    h = jnp.dot(h.astype(jnp.bfloat16), w2_ref[...],
                preferred_element_type=jnp.float32) + b2
    h = _gelu_tanh(_seg_layer_norm(h, m_seg, inv_h, g2, be2))

    # Output heads for all ensembles at once: (TB, N*H) @ (N*H, N) -> (TB, N)
    q = jnp.dot(h.astype(jnp.bfloat16), w3_ref[...],
                preferred_element_type=jnp.float32) + b3_ref[...]
    # Note: N=4 is lane-sparse; if N grows toward 128, keep/pad it lane-dense.
    out_ref[...] = q.astype(out_ref.dtype)


def init_qfuncs_params(key, obs_dim, act_dim, hidden_dim, n_ensembles):
    """Deterministic synthetic parameters (shapes match the PyTorch module)."""
    D = obs_dim + act_dim
    H = hidden_dim
    N = n_ensembles
    ks = jax.random.split(key, 6)
    scale1 = 1.0 / jnp.sqrt(D)
    scale2 = 1.0 / jnp.sqrt(H)
    params = {
        # Linear weights stored pre-transposed: x @ W
        "w1": jax.random.uniform(ks[0], (N, D, H), jnp.float32, -scale1, scale1),
        "b1": jax.random.uniform(ks[1], (N, 1, H), jnp.float32, -scale1, scale1),
        "g1": jnp.ones((N, 1, H), jnp.float32),
        "be1": jnp.zeros((N, 1, H), jnp.float32),
        "w2": jax.random.uniform(ks[2], (N, H, H), jnp.float32, -scale2, scale2),
        "b2": jax.random.uniform(ks[3], (N, 1, H), jnp.float32, -scale2, scale2),
        "g2": jnp.ones((N, 1, H), jnp.float32),
        "be2": jnp.zeros((N, 1, H), jnp.float32),
        "w3": jax.random.uniform(ks[4], (N, H, 1), jnp.float32, -scale2, scale2),
        "b3": jax.random.uniform(ks[5], (N, 1, 1), jnp.float32, -scale2, scale2),
    }
    return params


def _block_diag(blocks):
    """Simple block-diagonal assembly (done once, outside the kernel)."""
    n = len(blocks)
    rows = []
    for i, b in enumerate(blocks):
        row = [b if j == i else jnp.zeros((b.shape[0], blocks[j].shape[1]),
                                          b.dtype)
               for j in range(n)]
        rows.append(jnp.concatenate(row, axis=1))
    return jnp.concatenate(rows, axis=0)


def pack_qfuncs_params(params, obs_dim):
    """One-time packing of the ensemble params into lane-packed buffers.

    Matmul weights are stored in bf16 (MXU-native, halves weight DMA/VMEM);
    LayerNorm / bias vectors and the segment-sum matrix stay in f32.
    """
    w1 = params["w1"]                      # (N, D, H)
    N, D, H = w1.shape
    NH = N * H
    w1p = jnp.transpose(w1, (1, 0, 2)).reshape(D, NH)                # (D, NH)
    w1o = w1p[:obs_dim].astype(jnp.bfloat16)                         # (Do, NH)
    w1a = w1p[obs_dim:].astype(jnp.bfloat16)                         # (Da, NH)
    w2p = _block_diag([params["w2"][i] for i in range(N)]).astype(jnp.bfloat16)
    w3p = _block_diag([params["w3"][i] for i in range(N)]).astype(jnp.bfloat16)
    b3p = params["b3"].reshape(1, N)                                 # (1, N)
    vecs = jnp.concatenate(
        [params["b1"].reshape(1, NH), params["g1"].reshape(1, NH),
         params["be1"].reshape(1, NH), params["b2"].reshape(1, NH),
         params["g2"].reshape(1, NH), params["be2"].reshape(1, NH)],
        axis=0)                                                      # (6, NH)
    # Block-diagonal segment matrix for per-ensemble LN stats (built ONCE here,
    # not per grid step inside the kernel).
    row_blk = jnp.arange(NH, dtype=jnp.int32)[:, None] // H
    col_blk = jnp.arange(NH, dtype=jnp.int32)[None, :] // H
    m_seg = (row_blk == col_blk).astype(jnp.float32)                 # (NH, NH)
    return {"w1o": w1o, "w1a": w1a, "w2p": w2p, "w3p": w3p,
            "b3p": b3p, "vecs": vecs, "m_seg": m_seg}


def _const_spec(block_shape, index_map):
    """Grid-invariant input: single-buffer it when this JAX supports Buffered."""
    if hasattr(pl, "Buffered"):
        try:
            return pl.BlockSpec(block_shape, index_map,
                                pipeline_mode=pl.Buffered(1))
        except TypeError:
            pass
    return pl.BlockSpec(block_shape, index_map)


@jax.jit
def qfuncs_forward(obs, act, packed):
    """Equivalent of Qfuncs.forward: returns (..., N, 1)."""
    lead = obs.shape[:-1]
    Do = obs.shape[-1]
    Da = act.shape[-1]
    obs2 = obs.reshape(-1, Do).astype(jnp.float32)
    act2 = act.reshape(-1, Da).astype(jnp.float32)
    B = obs2.shape[0]
    NH = packed["w2p"].shape[0]
    N = packed["w3p"].shape[1]
    H = NH // N

    # Batch tiling.  Real per-tile VMEM footprint at TB=1024 is only a few MB,
    # so large tiles amortize the ~0.35us/step pipeline overhead.  For large B
    # use balanced tiles (no 512+8 cliff) and >= 2 tiles so both v7x
    # TensorCores get work on the "parallel" axis.
    TB_MAX = 1024
    if B <= 256:
        TB = B
    else:
        n_tiles = max(2, _cdiv(B, TB_MAX))
        TB = _round_up(_cdiv(B, n_tiles), 8)
    nb = _cdiv(B, TB)

    kernel = functools.partial(qfuncs_kernel, hidden_dim=H)

    out = pl.pallas_call(
        kernel,
        out_shape=jax.ShapeDtypeStruct((B, N), jnp.float32),
        grid_spec=pltpu.PrefetchScalarGridSpec(
            num_scalar_prefetch=0,
            grid=(nb,),
            in_specs=[
                pl.BlockSpec((TB, Do), lambda i: (i, 0)),       # obs (tiled)
                pl.BlockSpec((TB, Da), lambda i: (i, 0)),       # act (tiled)
                _const_spec((Do, NH), lambda i: (0, 0)),        # W1[obs rows]
                _const_spec((Da, NH), lambda i: (0, 0)),        # W1[act rows]
                _const_spec((NH, NH), lambda i: (0, 0)),        # W2 block-diag
                _const_spec((NH, N), lambda i: (0, 0)),         # W3 block-col
                _const_spec((1, N), lambda i: (0, 0)),          # b3
                _const_spec((6, NH), lambda i: (0, 0)),         # b1,g1,be1,b2,g2,be2
                _const_spec((NH, NH), lambda i: (0, 0)),        # m_seg
            ],
            out_specs=pl.BlockSpec((TB, N), lambda i: (i, 0)),
        ),
        compiler_params=pltpu.CompilerParams(
            dimension_semantics=("parallel",),
            vmem_limit_bytes=32 * 1024 * 1024),
    )(obs2, act2, packed["w1o"], packed["w1a"], packed["w2p"], packed["w3p"],
      packed["b3p"], packed["vecs"], packed["m_seg"])

    return out.reshape(*lead, N, 1)


def qfuncs_forward_ref(obs, act, params):
    """Pure-JAX f32 reference for correctness check (unpacked, per-ensemble)."""
    x = jnp.concatenate([obs, act], axis=-1).astype(jnp.float32)
    qs = []
    N = params["w1"].shape[0]
    for i in range(N):
        h = x @ params["w1"][i] + params["b1"][i][0]
        h = _layer_norm(h, params["g1"][i][0], params["be1"][i][0])
        h = _gelu_tanh(h)
        h = h @ params["w2"][i] + params["b2"][i][0]
        h = _layer_norm(h, params["g2"][i][0], params["be2"][i][0])
        h = _gelu_tanh(h)
        q = h @ params["w3"][i] + params["b3"][i][0]
        qs.append(q)
    return jnp.stack(qs, axis=-2)


if __name__ == "__main__":
    obs_dim, act_dim = 11, 5          # D = 16
    hidden_dim = 32
    n_ensembles = 4                   # N*H = 128 -> exactly one lane group
    batch = 6

    key = jax.random.PRNGKey(0)
    k_obs, k_act, k_par = jax.random.split(key, 3)
    obs = jax.random.normal(k_obs, (batch, obs_dim), jnp.float32)
    act = jax.random.normal(k_act, (batch, act_dim), jnp.float32)
    params = init_qfuncs_params(k_par, obs_dim, act_dim, hidden_dim, n_ensembles)
    packed = pack_qfuncs_params(params, obs_dim)

    q = qfuncs_forward(obs, act, packed)
    jax.block_until_ready(q)

    assert q.shape == (batch, n_ensembles, 1), q.shape
    q_ref = qfuncs_forward_ref(obs, act, params)
    # bf16 MXU inputs (f32 accumulation) vs the pure-f32 reference -> looser tol.
    err = float(jnp.max(jnp.abs(q - q_ref)))
    assert err < 2e-2, f"max abs error {err}"

    print("KERNEL_OK")
</pallas_src>

<mosaic_0001>
module attributes {stable_mosaic.version = 11 : i64} {
  func.func @qfuncs_kernel(%arg0: i32, %arg1: memref<6x11xf32, #tpu.memory_space<vmem>>, %arg2: memref<6x5xf32, #tpu.memory_space<vmem>>, %arg3: memref<11x128xbf16, #tpu.memory_space<vmem>>, %arg4: memref<5x128xbf16, #tpu.memory_space<vmem>>, %arg5: memref<128x128xbf16, #tpu.memory_space<vmem>>, %arg6: memref<128x4xbf16, #tpu.memory_space<vmem>>, %arg7: memref<1x4xf32, #tpu.memory_space<vmem>>, %arg8: memref<6x128xf32, #tpu.memory_space<vmem>>, %arg9: memref<128x128xf32, #tpu.memory_space<vmem>>, %arg10: memref<6x4xf32, #tpu.memory_space<vmem>>) attributes {dimension_semantics = [#tpu.dimension_semantics<parallel>], iteration_bounds = array<i64: 1>, scalar_prefetch = 0 : i64, scratch_operands = 0 : i64, tpu.core_type = #tpu.core_type<tc>, window_params = [{transform_indices = @transform_0, window_bounds = array<i64: 6, 11>}, {transform_indices = @transform_1, window_bounds = array<i64: 6, 5>}, {pipeline_mode = #tpu.pipeline_mode<synchronous>, transform_indices = @transform_2, window_bounds = array<i64: 11, 128>}, {pipeline_mode = #tpu.pipeline_mode<synchronous>, transform_indices = @transform_3, window_bounds = array<i64: 5, 128>}, {pipeline_mode = #tpu.pipeline_mode<synchronous>, transform_indices = @transform_4, window_bounds = array<i64: 128, 128>}, {pipeline_mode = #tpu.pipeline_mode<synchronous>, transform_indices = @transform_5, window_bounds = array<i64: 128, 4>}, {pipeline_mode = #tpu.pipeline_mode<synchronous>, transform_indices = @transform_6, window_bounds = array<i64: 1, 4>}, {pipeline_mode = #tpu.pipeline_mode<synchronous>, transform_indices = @transform_7, window_bounds = array<i64: 6, 128>}, {pipeline_mode = #tpu.pipeline_mode<synchronous>, transform_indices = @transform_8, window_bounds = array<i64: 128, 128>}, {transform_indices = @transform_9, window_bounds = array<i64: 6, 4>}]} {
    %c0 = arith.constant 0 : index
    %c0_0 = arith.constant 0 : index
    %0 = vector.load %arg9[%c0, %c0_0] : memref<128x128xf32, #tpu.memory_space<vmem>>, vector<128x128xf32>
    %c0_1 = arith.constant 0 : index
    %c0_2 = arith.constant 0 : index
    %1 = vector.load %arg8[%c0_1, %c0_2] : memref<6x128xf32, #tpu.memory_space<vmem>>, vector<1x128xf32>
    %c1 = arith.constant 1 : index
    %c0_3 = arith.constant 0 : index
    %2 = vector.load %arg8[%c1, %c0_3] : memref<6x128xf32, #tpu.memory_space<vmem>>, vector<1x128xf32>
    %c2 = arith.constant 2 : index
    %c0_4 = arith.constant 0 : index
    %3 = vector.load %arg8[%c2, %c0_4] : memref<6x128xf32, #tpu.memory_space<vmem>>, vector<1x128xf32>
    %c3 = arith.constant 3 : index
    %c0_5 = arith.constant 0 : index
    %4 = vector.load %arg8[%c3, %c0_5] : memref<6x128xf32, #tpu.memory_space<vmem>>, vector<1x128xf32>
    %c4 = arith.constant 4 : index
    %c0_6 = arith.constant 0 : index
    %5 = vector.load %arg8[%c4, %c0_6] : memref<6x128xf32, #tpu.memory_space<vmem>>, vector<1x128xf32>
    %c5 = arith.constant 5 : index
    %c0_7 = arith.constant 0 : index
    %6 = vector.load %arg8[%c5, %c0_7] : memref<6x128xf32, #tpu.memory_space<vmem>>, vector<1x128xf32>
    %c0_8 = arith.constant 0 : index
    %c0_9 = arith.constant 0 : index
    %7 = vector.load %arg1[%c0_8, %c0_9] : memref<6x11xf32, #tpu.memory_space<vmem>>, vector<6x11xf32>
    %8 = arith.truncf %7 : vector<6x11xf32> to vector<6x11xbf16>
    %c0_10 = arith.constant 0 : index
    %c0_11 = arith.constant 0 : index
    %9 = vector.load %arg2[%c0_10, %c0_11] : memref<6x5xf32, #tpu.memory_space<vmem>>, vector<6x5xf32>
    %10 = arith.truncf %9 : vector<6x5xf32> to vector<6x5xbf16>
    %c0_12 = arith.constant 0 : index
    %c0_13 = arith.constant 0 : index
    %11 = vector.load %arg3[%c0_12, %c0_13] : memref<11x128xbf16, #tpu.memory_space<vmem>>, vector<11x128xbf16>
    %cst = arith.constant dense<0.000000e+00> : vector<6x128xf32>
    %12 = tpu.matmul %8, %11, %cst {dimension_numbers = #tpu.dot_dimension_numbers<[1], [0], [0], [1], [0, 0, 1, 1], [], []>} : vector<6x11xbf16>, vector<11x128xbf16>, vector<6x128xf32> -> vector<6x128xf32>
    %c0_14 = arith.constant 0 : index
    %c0_15 = arith.constant 0 : index
    %13 = vector.load %arg4[%c0_14, %c0_15] : memref<5x128xbf16, #tpu.memory_space<vmem>>, vector<5x128xbf16>
    %cst_16 = arith.constant dense<0.000000e+00> : vector<6x128xf32>
    %14 = tpu.matmul %10, %13, %cst_16 {dimension_numbers = #tpu.dot_dimension_numbers<[1], [0], [0], [1], [0, 0, 1, 1], [], []>} : vector<6x5xbf16>, vector<5x128xbf16>, vector<6x128xf32> -> vector<6x128xf32>
    %15 = arith.addf %12, %14 : vector<6x128xf32>
    %16 = vector.broadcast %1 : vector<1x128xf32> to vector<6x128xf32>
    %17 = arith.addf %15, %16 : vector<6x128xf32>
    %cst_17 = arith.constant dense<0.000000e+00> : vector<6x128xf32>
    %18 = tpu.matmul %17, %0, %cst_17 {dimension_numbers = #tpu.dot_dimension_numbers<[1], [0], [0], [1], [0, 0, 1, 1], [], []>} : vector<6x128xf32>, vector<128x128xf32>, vector<6x128xf32> -> vector<6x128xf32>
    %19 = arith.mulf %17, %17 : vector<6x128xf32>
    %cst_18 = arith.constant dense<0.000000e+00> : vector<6x128xf32>
    %20 = tpu.matmul %19, %0, %cst_18 {dimension_numbers = #tpu.dot_dimension_numbers<[1], [0], [0], [1], [0, 0, 1, 1], [], []>} : vector<6x128xf32>, vector<128x128xf32>, vector<6x128xf32> -> vector<6x128xf32>
    %cst_19 = arith.constant 3.125000e-02 : f32
    %21 = vector.broadcast %cst_19 : f32 to vector<6x128xf32>
    %22 = arith.mulf %18, %21 : vector<6x128xf32>
    %cst_20 = arith.constant 3.125000e-02 : f32
    %23 = vector.broadcast %cst_20 : f32 to vector<6x128xf32>
    %24 = arith.mulf %20, %23 : vector<6x128xf32>
    %25 = arith.mulf %22, %22 : vector<6x128xf32>
    %26 = arith.subf %24, %25 : vector<6x128xf32>
    %cst_21 = arith.constant 0.000000e+00 : f32
    %27 = vector.broadcast %cst_21 : f32 to vector<6x128xf32>
    %28 = arith.maximumf %26, %27 : vector<6x128xf32>
    %29 = arith.subf %17, %22 : vector<6x128xf32>
    %cst_22 = arith.constant 9.99999974E-6 : f32
    %30 = vector.broadcast %cst_22 : f32 to vector<6x128xf32>
    %31 = arith.addf %28, %30 : vector<6x128xf32>
    %32 = math.rsqrt %31 : vector<6x128xf32>
    %33 = arith.mulf %29, %32 : vector<6x128xf32>
    %34 = vector.broadcast %2 : vector<1x128xf32> to vector<6x128xf32>
    %35 = arith.mulf %33, %34 : vector<6x128xf32>
    %36 = vector.broadcast %3 : vector<1x128xf32> to vector<6x128xf32>
    %37 = arith.addf %35, %36 : vector<6x128xf32>
    %cst_23 = arith.constant 5.000000e-01 : f32
    %38 = vector.broadcast %cst_23 : f32 to vector<6x128xf32>
    %39 = arith.mulf %38, %37 : vector<6x128xf32>
    %cst_24 = arith.constant 4.471500e-02 : f32
    %40 = vector.broadcast %cst_24 : f32 to vector<6x128xf32>
    %41 = arith.mulf %40, %37 : vector<6x128xf32>
    %42 = arith.mulf %41, %37 : vector<6x128xf32>
    %43 = arith.mulf %42, %37 : vector<6x128xf32>
    %44 = arith.addf %37, %43 : vector<6x128xf32>
    %cst_25 = arith.constant 0.797884583 : f32
    %45 = vector.broadcast %cst_25 : f32 to vector<6x128xf32>
    %46 = arith.mulf %45, %44 : vector<6x128xf32>
    %47 = math.tanh %46 : vector<6x128xf32>
    %cst_26 = arith.constant 1.000000e+00 : f32
    %48 = vector.broadcast %cst_26 : f32 to vector<6x128xf32>
    %49 = arith.addf %48, %47 : vector<6x128xf32>
    %50 = arith.mulf %39, %49 : vector<6x128xf32>
    %51 = arith.truncf %50 : vector<6x128xf32> to vector<6x128xbf16>
    %c0_27 = arith.constant 0 : index
    %c0_28 = arith.constant 0 : index
    %52 = vector.load %arg5[%c0_27, %c0_28] : memref<128x128xbf16, #tpu.memory_space<vmem>>, vector<128x128xbf16>
    %cst_29 = arith.constant dense<0.000000e+00> : vector<6x128xf32>
    %53 = tpu.matmul %51, %52, %cst_29 {dimension_numbers = #tpu.dot_dimension_numbers<[1], [0], [0], [1], [0, 0, 1, 1], [], []>} : vector<6x128xbf16>, vector<128x128xbf16>, vector<6x128xf32> -> vector<6x128xf32>
    %54 = vector.broadcast %4 : vector<1x128xf32> to vector<6x128xf32>
    %55 = arith.addf %53, %54 : vector<6x128xf32>
    %cst_30 = arith.constant dense<0.000000e+00> : vector<6x128xf32>
    %56 = tpu.matmul %55, %0, %cst_30 {dimension_numbers = #tpu.dot_dimension_numbers<[1], [0], [0], [1], [0, 0, 1, 1], [], []>} : vector<6x128xf32>, vector<128x128xf32>, vector<6x128xf32> -> vector<6x128xf32>
    %57 = arith.mulf %55, %55 : vector<6x128xf32>
    %cst_31 = arith.constant dense<0.000000e+00> : vector<6x128xf32>
    %58 = tpu.matmul %57, %0, %cst_31 {dimension_numbers = #tpu.dot_dimension_numbers<[1], [0], [0], [1], [0, 0, 1, 1], [], []>} : vector<6x128xf32>, vector<128x128xf32>, vector<6x128xf32> -> vector<6x128xf32>
    %cst_32 = arith.constant 3.125000e-02 : f32
    %59 = vector.broadcast %cst_32 : f32 to vector<6x128xf32>
    %60 = arith.mulf %56, %59 : vector<6x128xf32>
    %cst_33 = arith.constant 3.125000e-02 : f32
    %61 = vector.broadcast %cst_33 : f32 to vector<6x128xf32>
    %62 = arith.mulf %58, %61 : vector<6x128xf32>
    %63 = arith.mulf %60, %60 : vector<6x128xf32>
    %64 = arith.subf %62, %63 : vector<6x128xf32>
    %cst_34 = arith.constant 0.000000e+00 : f32
    %65 = vector.broadcast %cst_34 : f32 to vector<6x128xf32>
    %66 = arith.maximumf %64, %65 : vector<6x128xf32>
    %67 = arith.subf %55, %60 : vector<6x128xf32>
    %cst_35 = arith.constant 9.99999974E-6 : f32
    %68 = vector.broadcast %cst_35 : f32 to vector<6x128xf32>
    %69 = arith.addf %66, %68 : vector<6x128xf32>
    %70 = math.rsqrt %69 : vector<6x128xf32>
    %71 = arith.mulf %67, %70 : vector<6x128xf32>
    %72 = vector.broadcast %5 : vector<1x128xf32> to vector<6x128xf32>
    %73 = arith.mulf %71, %72 : vector<6x128xf32>
    %74 = vector.broadcast %6 : vector<1x128xf32> to vector<6x128xf32>
    %75 = arith.addf %73, %74 : vector<6x128xf32>
    %cst_36 = arith.constant 5.000000e-01 : f32
    %76 = vector.broadcast %cst_36 : f32 to vector<6x128xf32>
    %77 = arith.mulf %76, %75 : vector<6x128xf32>
    %cst_37 = arith.constant 4.471500e-02 : f32
    %78 = vector.broadcast %cst_37 : f32 to vector<6x128xf32>
    %79 = arith.mulf %78, %75 : vector<6x128xf32>
    %80 = arith.mulf %79, %75 : vector<6x128xf32>
    %81 = arith.mulf %80, %75 : vector<6x128xf32>
    %82 = arith.addf %75, %81 : vector<6x128xf32>
    %cst_38 = arith.constant 0.797884583 : f32
    %83 = vector.broadcast %cst_38 : f32 to vector<6x128xf32>
    %84 = arith.mulf %83, %82 : vector<6x128xf32>
    %85 = math.tanh %84 : vector<6x128xf32>
    %cst_39 = arith.constant 1.000000e+00 : f32
    %86 = vector.broadcast %cst_39 : f32 to vector<6x128xf32>
    %87 = arith.addf %86, %85 : vector<6x128xf32>
    %88 = arith.mulf %77, %87 : vector<6x128xf32>
    %89 = arith.truncf %88 : vector<6x128xf32> to vector<6x128xbf16>
    %c0_40 = arith.constant 0 : index
    %c0_41 = arith.constant 0 : index
    %90 = vector.load %arg6[%c0_40, %c0_41] : memref<128x4xbf16, #tpu.memory_space<vmem>>, vector<128x4xbf16>
    %cst_42 = arith.constant dense<0.000000e+00> : vector<6x4xf32>
    %91 = tpu.matmul %89, %90, %cst_42 {dimension_numbers = #tpu.dot_dimension_numbers<[1], [0], [0], [1], [0, 0, 1, 1], [], []>} : vector<6x128xbf16>, vector<128x4xbf16>, vector<6x4xf32> -> vector<6x4xf32>
    %c0_43 = arith.constant 0 : index
    %c0_44 = arith.constant 0 : index
    %92 = vector.load %arg7[%c0_43, %c0_44] : memref<1x4xf32, #tpu.memory_space<vmem>>, vector<1x4xf32>
    %93 = vector.broadcast %92 : vector<1x4xf32> to vector<6x4xf32>
    %94 = arith.addf %91, %93 : vector<6x4xf32>
    %c0_45 = arith.constant 0 : index
    %c0_46 = arith.constant 0 : index
    %95 = vector.load %arg10[%c0_45, %c0_46] : memref<6x4xf32, #tpu.memory_space<vmem>>, vector<6x4xf32>
    tpu.vector_store %arg10[%c0_45, %c0_46], %94 {strides = array<i32>} : memref<6x4xf32, #tpu.memory_space<vmem>>, vector<6x4xf32>,
    return
  }
  func.func @transform_0(%arg0: i32) -> (i32, i32) {
    %c0_i32 = arith.constant 0 : i32
    %c0_i32_0 = arith.constant 0 : i32
    return %arg0, %c0_i32 : i32, i32
  }
  func.func @transform_1(%arg0: i32) -> (i32, i32) {
    %c0_i32 = arith.constant 0 : i32
    %c0_i32_0 = arith.constant 0 : i32
    return %arg0, %c0_i32 : i32, i32
  }
  func.func @transform_2(%arg0: i32) -> (i32, i32) {
    %c0_i32 = arith.constant 0 : i32
    %c0_i32_0 = arith.constant 0 : i32
    %c0_i32_1 = arith.constant 0 : i32
    return %c0_i32, %c0_i32_0 : i32, i32
  }
  func.func @transform_3(%arg0: i32) -> (i32, i32) {
    %c0_i32 = arith.constant 0 : i32
    %c0_i32_0 = arith.constant 0 : i32
    %c0_i32_1 = arith.constant 0 : i32
    return %c0_i32, %c0_i32_0 : i32, i32
  }
  func.func @transform_4(%arg0: i32) -> (i32, i32) {
    %c0_i32 = arith.constant 0 : i32
    %c0_i32_0 = arith.constant 0 : i32
    %c0_i32_1 = arith.constant 0 : i32
    return %c0_i32, %c0_i32_0 : i32, i32
  }
  func.func @transform_5(%arg0: i32) -> (i32, i32) {
    %c0_i32 = arith.constant 0 : i32
    %c0_i32_0 = arith.constant 0 : i32
    %c0_i32_1 = arith.constant 0 : i32
    return %c0_i32, %c0_i32_0 : i32, i32
  }
  func.func @transform_6(%arg0: i32) -> (i32, i32) {
    %c0_i32 = arith.constant 0 : i32
    %c0_i32_0 = arith.constant 0 : i32
    %c0_i32_1 = arith.constant 0 : i32
    return %c0_i32, %c0_i32_0 : i32, i32
  }
  func.func @transform_7(%arg0: i32) -> (i32, i32) {
    %c0_i32 = arith.constant 0 : i32
    %c0_i32_0 = arith.constant 0 : i32
    %c0_i32_1 = arith.constant 0 : i32
    return %c0_i32, %c0_i32_0 : i32, i32
  }
  func.func @transform_8(%arg0: i32) -> (i32, i32) {
    %c0_i32 = arith.constant 0 : i32
    %c0_i32_0 = arith.constant 0 : i32
    %c0_i32_1 = arith.constant 0 : i32
    return %c0_i32, %c0_i32_0 : i32, i32
  }
  func.func @transform_9(%arg0: i32) -> (i32, i32) {
    %c0_i32 = arith.constant 0 : i32
    %c0_i32_0 = arith.constant 0 : i32
    return %arg0, %c0_i32 : i32, i32
  }
}

</mosaic_0001>

<llo_original>
// kernel: qfuncs_forward.1
$region0: #{qfuncs_forward.1}
  #allocation0 [shape = 'u32[]', space=smem, size = 0x4, offset = 0x4, fixed_abs, tag = 'smem constant byte address 0x4 - core index']
  #allocation1 [shape = 'u32[144,128]{1,0:T(1,128)}', space=vmem, size = 0x12000, scoped, tag = 'internal scratch']
  %s0 = inlined_call_operand.vmem [shape: f32[6,11], index: 0, kind: input, shape index: {}]
  %s1 = inlined_call_operand.vmem [shape: f32[6,5], index: 1, kind: input, shape index: {}]
  %s2 = inlined_call_operand.vmem [shape: bf16[11,128], index: 2, kind: input, shape index: {}]
  %s3 = inlined_call_operand.vmem [shape: bf16[5,128], index: 3, kind: input, shape index: {}]
  %s4 = inlined_call_operand.vmem [shape: bf16[128,128], index: 4, kind: input, shape index: {}]
  %s5 = inlined_call_operand.vmem [shape: bf16[128,4], index: 5, kind: input, shape index: {}]
  %s6 = inlined_call_operand.hbm [shape: f32[1,4], index: 6, kind: input, shape index: {}]
  %s7 = inlined_call_operand.hbm [shape: f32[6,128], index: 7, kind: input, shape index: {}]
  %s8 = inlined_call_operand.hbm [shape: f32[128,128], index: 8, kind: input, shape index: {}]
  %s9 = inlined_call_operand.vmem [shape: f32[6,4], index: 9, kind: output, shape index: {}]
  %s10 = sld [smem:[#allocation0]]
  $region58: #{qfuncs_forward.1} parent=0
    _
  %s12 = ssub.s32 1, %s10
  %s13 = scalar_select 0, %s12, %s10
  $region1: #{qfuncs_forward.1} parent=0
    #allocation2 [shape = 'u8[512]{0}', space=vmem, size = 0x400, scoped, tag = 'input window, operand 6, single buffered']
    #allocation3 [shape = 's32[1]{0}', space=sflag, size = 0x4, scoped, tag = 'scoped memory for qfuncs_forward.1']
    #allocation4 [shape = 'u8[4096]{0}', space=vmem, size = 0x1000, scoped, tag = 'input window, operand 7, single buffered']
    #allocation5 [shape = 's32[1]{0}', space=sflag, size = 0x4, scoped, tag = 'scoped memory for qfuncs_forward.1']
    #allocation6 [shape = 'u8[65536]{0}', space=vmem, size = 0x10000, scoped, tag = 'input window, operand 8, single buffered']
    %14 = vsyncpa [#allocation3], 0
    %15 = vsyncpa [#allocation5], 0
    // Predicated region
    $region2: #{qfuncs_forward.1} parent=1 // pred_check
      _
    $region3: #{qfuncs_forward.1} parent=1 // pred_check_branch
      %17 = sbr.rel (0) target = $region5
    $region4: #{qfuncs_forward.1} parent=1 // pred_region
      _
    $region5: #{qfuncs_forward.1} parent=1 // pred_fallthru
      _
    // Predicated region
    $region6: #{qfuncs_forward.1} parent=1 // pred_check
      _
    $region7: #{qfuncs_forward.1} parent=1 // pred_check_branch
      %19 = sbr.rel (0) target = $region9
    $region8: #{qfuncs_forward.1} parent=1 // pred_region
      _
    $region9: #{qfuncs_forward.1} parent=1 // pred_fallthru
      _
    // Predicated region
    $region10: #{qfuncs_forward.1} parent=1 // pred_check
      _
    $region11: #{qfuncs_forward.1} parent=1 // pred_check_branch
      %21 = sbr.rel (0) target = $region13
    $region12: #{qfuncs_forward.1} parent=1 // pred_region
      _
    $region13: #{qfuncs_forward.1} parent=1 // pred_fallthru
      _
    // Predicated region
    $region14: #{qfuncs_forward.1} parent=1 // pred_check
      _
    $region15: #{qfuncs_forward.1} parent=1 // pred_check_branch
      %23 = sbr.rel (0) target = $region17
    $region16: #{qfuncs_forward.1} parent=1 // pred_region
      _
    $region17: #{qfuncs_forward.1} parent=1 // pred_fallthru
      _
    // Predicated region
    $region18: #{qfuncs_forward.1} parent=1 // pred_check
      _
    $region19: #{qfuncs_forward.1} parent=1 // pred_check_branch
      %25 = sbr.rel (0) target = $region21
    $region20: #{qfuncs_forward.1} parent=1 // pred_region
      _
    $region21: #{qfuncs_forward.1} parent=1 // pred_fallthru
      _
    // Predicated region
    $region22: #{qfuncs_forward.1} parent=1 // pred_check
      _
    $region23: #{qfuncs_forward.1} parent=1 // pred_check_branch
      %27 = sbr.rel (0) target = $region25
    $region24: #{qfuncs_forward.1} parent=1 // pred_region
      _
    $region25: #{qfuncs_forward.1} parent=1 // pred_fallthru
      _
    // Predicated region
    $region26: #{qfuncs_forward.1} parent=1 // pred_check
      _
    $region27: #{qfuncs_forward.1} parent=1 // pred_check_branch
      %29 = sbr.rel (0) target = $region29
    $region28: #{qfuncs_forward.1} parent=1 // pred_region
      %s31 = ssub.s32 16, 16
      %32 = vsyncadd [#allocation3], %s31
      %s34 = sshll.u32 [#allocation2], 4
      %s35 = int_to_ptr.vmem [resolvable:$true] %s34
      %37 = dma.hbm_to_vmem [thread:$0]  %s6, 16, %s35, [#allocation3]
    $region29: #{qfuncs_forward.1} parent=1 // pred_fallthru
      _
    // Predicated region
    $region30: #{qfuncs_forward.1} parent=1 // pred_check
      _
    $region31: #{qfuncs_forward.1} parent=1 // pred_check_branch
      %39 = sbr.rel (0) target = $region33
    $region32: #{qfuncs_forward.1} parent=1 // pred_region
      %s41 = ssub.s32 128, 128
      %42 = vsyncadd [#allocation5], %s41
      %s44 = sshll.u32 [#allocation4], 4
      %s45 = int_to_ptr.vmem [resolvable:$true] %s44
      %47 = dma.hbm_to_vmem [thread:$0]  %s7, 128, %s45, [#allocation5]
    $region33: #{qfuncs_forward.1} parent=1 // pred_fallthru
      _
    // Predicated region
    $region34: #{qfuncs_forward.1} parent=1 // pred_check
      _
    $region35: #{qfuncs_forward.1} parent=1 // pred_check_branch
      %49 = sbr.rel (0) target = $region37
    $region36: #{qfuncs_forward.1} parent=1 // pred_region
      %s51 = ssub.s32 2048, 2048
      %52 = vsyncadd [#allocation5], %s51
      %s53 = sshll.u32 [#allocation6], 4
      %s54 = int_to_ptr.vmem [resolvable:$true] %s53
      %59 = dma.hbm_to_vmem [thread:$0]  %s8, 2048, %s54, [#allocation5], 128, 128, 8
    $region37: #{qfuncs_forward.1} parent=1 // pred_fallthru
      _
    // Predicated region
    $region38: #{qfuncs_forward.1} parent=1 // pred_check
      _
    $region39: #{qfuncs_forward.1} parent=1 // pred_check_branch
      %61 = sbr.rel (0) target = $region41
    $region40: #{qfuncs_forward.1} parent=1 // pred_region
      %62 = dma.done [#allocation3], 16
    $region41: #{qfuncs_forward.1} parent=1 // pred_fallthru
      _
    // Predicated region
    $region42: #{qfuncs_forward.1} parent=1 // pred_check
      _
    $region43: #{qfuncs_forward.1} parent=1 // pred_check_branch
      %64 = sbr.rel (0) target = $region45
    $region44: #{qfuncs_forward.1} parent=1 // pred_region
      %65 = dma.done [#allocation5], 128
    $region45: #{qfuncs_forward.1} parent=1 // pred_fallthru
      _
    // Predicated region
    $region46: #{qfuncs_forward.1} parent=1 // pred_check
      _
    $region47: #{qfuncs_forward.1} parent=1 // pred_check_branch
      %67 = sbr.rel (0) target = $region49
    $region48: #{qfuncs_forward.1} parent=1 // pred_region
      %68 = dma.done [#allocation5], 2048
    $region49: #{qfuncs_forward.1} parent=1 // pred_fallthru
      _
    %v70 = vld [vmem:[#allocation6] sm:$0xff]
    %v71 = vld [vmem:[#allocation6 + $0x8] sm:$0xff]
    %v72 = vld [vmem:[#allocation6 + $0x10] sm:$0xff]
    %v73 = vld [vmem:[#allocation6 + $0x18] sm:$0xff]
    %v74 = vld [vmem:[#allocation6 + $0x20] sm:$0xff]
    %v75 = vld [vmem:[#allocation6 + $0x28] sm:$0xff]
    %v76 = vld [vmem:[#allocation6 + $0x30] sm:$0xff]
    %v77 = vld [vmem:[#allocation6 + $0x38] sm:$0xff]
    %v78 = vld [vmem:[#allocation6 + $0x40] sm:$0xff]
    %v79 = vld [vmem:[#allocation6 + $0x48] sm:$0xff]
    %v80 = vld [vmem:[#allocation6 + $0x50] sm:$0xff]
    %v81 = vld [vmem:[#allocation6 + $0x58] sm:$0xff]
    %v82 = vld [vmem:[#allocation6 + $0x60] sm:$0xff]
    %v83 = vld [vmem:[#allocation6 + $0x68] sm:$0xff]
    %v84 = vld [vmem:[#allocation6 + $0x70] sm:$0xff]
    %v85 = vld [vmem:[#allocation6 + $0x78] sm:$0xff]
    %v86 = vld [vmem:[#allocation4] sm:$0x1]
    %v87 = vld [vmem:[#allocation4 + $0x1] sm:$0x1]
    %v88 = vld [vmem:[#allocation4 + $0x2] sm:$0x1]
    %v89 = vld [vmem:[#allocation4 + $0x3] sm:$0x1]
    %v90 = vld [vmem:[#allocation4 + $0x4] sm:$0x1]
    %v91 = vld [vmem:[#allocation4 + $0x5] sm:$0x1]
    %v92 = vld [vmem:[%s0] sm:$0x3f]
    %v93 = vpack.c.bf16 %v92, %v92
    %v94 = vld [vmem:[%s1] sm:$0x3f]
    %v95 = vpack.c.bf16 %v94, %v94
    %v96 = vld [vmem:[%s2] sm:$0xf]
    %v97 = vld [vmem:[%s2 + $0x4] sm:$0x3]
    %v98 = vld [vmem:[%s3] sm:$0x7]
    %vm99 = vcmask 39936
    %v101 = vsel %vm99, %v95, 0
    %vm103 = vcmask 1041408
    %vm104 = vcmask 1042432
    %v105 = vsel %vm103, 4294967295, 65535
    %v106 = vsel %vm104, %v105, 0
    %v108 = vand.u32 %v98, %v106
    %110 = vmatprep.subr.bf16.mxu0 0
    %111 = vmatpush1.bf16.msra.mxu0 %v108
    %112 = vmatprep.subr.bf16.mxu0 0
    %113 = vmatpush1.bf16.msra.mxu0 0
    %114 = vmatprep.subr.bf16.mxu0 0
    %115 = vmatpush1.bf16.msra.mxu0 0
    %116 = vmatprep.subr.bf16.mxu0 0
    %117 = vmatpush1.bf16.msra.mxu0 0
    %118 = vmatprep.subr.bf16.mxu0 0
    %119 = vmatpush1.bf16.msra.mxu0 0
    %120 = vmatprep.subr.bf16.mxu0 0
    %121 = vmatpush1.bf16.msra.mxu0 0
    %122 = vmatprep.subr.bf16.mxu0 0
    %123 = vmatpush1.bf16.msra.mxu0 0
    %124 = vmatprep.subr.bf16.mxu0 0
    %125 = vmatpush1.bf16.msra.mxu0 0
    %126 = vmatprep.subr.bf16.mxu0 0
    %127 = vmatpush1.bf16.msra.mxu0 0
    %128 = vmatprep.subr.bf16.mxu0 0
    %129 = vmatpush1.bf16.msra.mxu0 0
    %130 = vmatprep.subr.bf16.mxu0 0
    %131 = vmatpush1.bf16.msra.mxu0 0
    %132 = vmatprep.subr.bf16.mxu0 0
    %133 = vmatpush1.bf16.msra.mxu0 0
    %134 = vmatprep.subr.bf16.mxu0 0
    %135 = vmatpush1.bf16.msra.mxu0 0
    %136 = vmatprep.subr.bf16.mxu0 0
    %137 = vmatpush1.bf16.msra.mxu0 0
    %138 = vmatprep.subr.bf16.mxu0 0
    %139 = vmatpush1.bf16.msra.mxu0 0
    %140 = vmatprep.subr.bf16.mxu0 0
    %141 = vmatpush1.bf16.msra.mxu0 0
    %142 = vmatprep.mubr.bf16.mxu0 0
    %143 = vmatmul.mubr.bf16.gmra.mrb[0].mxu0 %v101
    %v144 = vpop.f32.mrb[0].mxu0
    %v145 = vadd.f32 0.0, %v144
    %v146 = vpop.f32.mrb[0].mxu0
    %v147 = vpop.f32.mrb[0].mxu0
    %v148 = vpop.f32.mrb[0].mxu0
    %149 = vdwg.mxu0
    %v152 = vunpack.c.l.b16 %v96
    %v153 = vunpack.c.l.b16 %v97
    %v154 = vpack.c.b16 %v153, %v152
    %vm155 = vcmask 89088
    %v157 = vsel %vm155, %v93, 0
    %vm159 = vcmask 1044480
    %vm160 = vcmask 1045504
    %v161 = vsel %vm159, 4294967295, 65535
    %v162 = vsel %vm160, %v161, 0
    %v164 = vand.u32 %v154, %v162
    %166 = vmatprep.subr.bf16.mxu0 0
    %167 = vmatpush1.bf16.msra.mxu0 %v164
    %168 = vmatprep.subr.bf16.mxu0 0
    %169 = vmatpush1.bf16.msra.mxu0 0
    %170 = vmatprep.subr.bf16.mxu0 0
    %171 = vmatpush1.bf16.msra.mxu0 0
    %172 = vmatprep.subr.bf16.mxu0 0
    %173 = vmatpush1.bf16.msra.mxu0 0
    %174 = vmatprep.subr.bf16.mxu0 0
    %175 = vmatpush1.bf16.msra.mxu0 0
    %176 = vmatprep.subr.bf16.mxu0 0
    %177 = vmatpush1.bf16.msra.mxu0 0
    %178 = vmatprep.subr.bf16.mxu0 0
    %179 = vmatpush1.bf16.msra.mxu0 0
    %180 = vmatprep.subr.bf16.mxu0 0
    %181 = vmatpush1.bf16.msra.mxu0 0
    %182 = vmatprep.subr.bf16.mxu0 0
    %183 = vmatpush1.bf16.msra.mxu0 0
    %184 = vmatprep.subr.bf16.mxu0 0
    %185 = vmatpush1.bf16.msra.mxu0 0
    %186 = vmatprep.subr.bf16.mxu0 0
    %187 = vmatpush1.bf16.msra.mxu0 0
    %188 = vmatprep.subr.bf16.mxu0 0
    %189 = vmatpush1.bf16.msra.mxu0 0
    %190 = vmatprep.subr.bf16.mxu0 0
    %191 = vmatpush1.bf16.msra.mxu0 0
    %192 = vmatprep.subr.bf16.mxu0 0
    %193 = vmatpush1.bf16.msra.mxu0 0
    %194 = vmatprep.subr.bf16.mxu0 0
    %195 = vmatpush1.bf16.msra.mxu0 0
    %196 = vmatprep.subr.bf16.mxu0 0
    %197 = vmatpush1.bf16.msra.mxu0 0
    %198 = vmatprep.mubr.bf16.mxu0 0
    %199 = vmatmul.mubr.bf16.gmra.mrb[0].mxu0 %v157
    %v200 = vpop.f32.mrb[0].mxu0
    %v201 = vadd.f32 %v145, %v200
    %v202 = vpop.f32.mrb[0].mxu0
    %v203 = vpop.f32.mrb[0].mxu0
    %v204 = vpop.f32.mrb[0].mxu0
    %205 = vdwg.mxu0
    %v206 = vlaneseq
    %v207 = vshrl.u32 %v206, 7
    %v208 = vsub.s32 0, %v207
    %v209 = vrot.slane %v86, %v208
    %v210 = vadd.f32 %v201, %v209
    %211 = vmatprep.subr.mxu0 0.0
    %212 = vmatpush1.msra.mxu0 %v70
    %213 = vmatprep.subr.mxu0 0.0
    %214 = vmatpush1.msra.mxu0 %v71
    %215 = vmatprep.subr.mxu0 0.0
    %216 = vmatpush1.msra.mxu0 %v72
    %217 = vmatprep.subr.mxu0 0.0
    %218 = vmatpush1.msra.mxu0 %v73
    %219 = vmatprep.subr.mxu0 0.0
    %220 = vmatpush1.msra.mxu0 %v74
    %221 = vmatprep.subr.mxu0 0.0
    %222 = vmatpush1.msra.mxu0 %v75
    %223 = vmatprep.subr.mxu0 0.0
    %224 = vmatpush1.msra.mxu0 %v76
    %225 = vmatprep.subr.mxu0 0.0
    %226 = vmatpush1.msra.mxu0 %v77
    %227 = vmatprep.subr.mxu0 0.0
    %228 = vmatpush1.msra.mxu0 %v78
    %229 = vmatprep.subr.mxu0 0.0
    %230 = vmatpush1.msra.mxu0 %v79
    %231 = vmatprep.subr.mxu0 0.0
    %232 = vmatpush1.msra.mxu0 %v80
    %233 = vmatprep.subr.mxu0 0.0
    %234 = vmatpush1.msra.mxu0 %v81
    %235 = vmatprep.subr.mxu0 0.0
    %236 = vmatpush1.msra.mxu0 %v82
    %237 = vmatprep.subr.mxu0 0.0
    %238 = vmatpush1.msra.mxu0 %v83
    %239 = vmatprep.subr.mxu0 0.0
    %240 = vmatpush1.msra.mxu0 %v84
    %241 = vmatprep.subr.mxu0 0.0
    %242 = vmatpush1.msra.mxu0 %v85
    %243 = vmatprep.subr.mxu0 0.0
    %244 = vmatpush1.msra.mxu0 0.0
    %245 = vmatprep.subr.mxu0 0.0
    %246 = vmatpush1.msra.mxu0 0.0
    %247 = vmatprep.subr.mxu0 0.0
    %248 = vmatpush1.msra.mxu0 0.0
    %249 = vmatprep.subr.mxu0 0.0
    %250 = vmatpush1.msra.mxu0 0.0
    %251 = vmatprep.subr.mxu0 0.0
    %252 = vmatpush1.msra.mxu0 0.0
    %253 = vmatprep.subr.mxu0 0.0
    %254 = vmatpush1.msra.mxu0 0.0
    %255 = vmatprep.subr.mxu0 0.0
    %256 = vmatpush1.msra.mxu0 0.0
    %257 = vmatprep.subr.mxu0 0.0
    %258 = vmatpush1.msra.mxu0 0.0
    %259 = vmatprep.subr.mxu0 0.0
    %260 = vmatpush1.msra.mxu0 0.0
    %261 = vmatprep.subr.mxu0 0.0
    %262 = vmatpush1.msra.mxu0 0.0
    %263 = vmatprep.subr.mxu0 0.0
    %264 = vmatpush1.msra.mxu0 0.0
    %265 = vmatprep.subr.mxu0 0.0
    %266 = vmatpush1.msra.mxu0 0.0
    %267 = vmatprep.subr.mxu0 0.0
    %268 = vmatpush1.msra.mxu0 0.0
    %269 = vmatprep.subr.mxu0 0.0
    %270 = vmatpush1.msra.mxu0 0.0
    %271 = vmatprep.subr.mxu0 0.0
    %272 = vmatpush1.msra.mxu0 0.0
    %273 = vmatprep.subr.mxu0 0.0
    %274 = vmatpush1.msra.mxu0 0.0
    %275 = vmatprep.mubr.f32.mxu0 0.0
    %276 = vmatmul.mubr.f32.gmra.mrb[0].mxu0 %v210
    %v277 = vpop.f32.mrb[0].mxu0
    %v278 = vadd.f32 0.0, %v277
    %v279 = vpop.f32.mrb[0].mxu0
    %280 = vdwg.mxu0
    %v281 = vmul.f32 %v210, %v210
    %282 = vmatprep.subr.mxu0 0.0
    %283 = vmatpush1.msra.mxu0 %v70
    %284 = vmatprep.subr.mxu0 0.0
    %285 = vmatpush1.msra.mxu0 %v71
    %286 = vmatprep.subr.mxu0 0.0
    %287 = vmatpush1.msra.mxu0 %v72
    %288 = vmatprep.subr.mxu0 0.0
    %289 = vmatpush1.msra.mxu0 %v73
    %290 = vmatprep.subr.mxu0 0.0
    %291 = vmatpush1.msra.mxu0 %v74
    %292 = vmatprep.subr.mxu0 0.0
    %293 = vmatpush1.msra.mxu0 %v75
    %294 = vmatprep.subr.mxu0 0.0
    %295 = vmatpush1.msra.mxu0 %v76
    %296 = vmatprep.subr.mxu0 0.0
    %297 = vmatpush1.msra.mxu0 %v77
    %298 = vmatprep.subr.mxu0 0.0
    %299 = vmatpush1.msra.mxu0 %v78
    %300 = vmatprep.subr.mxu0 0.0
    %301 = vmatpush1.msra.mxu0 %v79
    %302 = vmatprep.subr.mxu0 0.0
    %303 = vmatpush1.msra.mxu0 %v80
    %304 = vmatprep.subr.mxu0 0.0
    %305 = vmatpush1.msra.mxu0 %v81
    %306 = vmatprep.subr.mxu0 0.0
    %307 = vmatpush1.msra.mxu0 %v82
    %308 = vmatprep.subr.mxu0 0.0
    %309 = vmatpush1.msra.mxu0 %v83
    %310 = vmatprep.subr.mxu0 0.0
    %311 = vmatpush1.msra.mxu0 %v84
    %312 = vmatprep.subr.mxu0 0.0
    %313 = vmatpush1.msra.mxu0 %v85
    %314 = vmatprep.subr.mxu0 0.0
    %315 = vmatpush1.msra.mxu0 0.0
    %316 = vmatprep.subr.mxu0 0.0
    %317 = vmatpush1.msra.mxu0 0.0
    %318 = vmatprep.subr.mxu0 0.0
    %319 = vmatpush1.msra.mxu0 0.0
    %320 = vmatprep.subr.mxu0 0.0
    %321 = vmatpush1.msra.mxu0 0.0
    %322 = vmatprep.subr.mxu0 0.0
    %323 = vmatpush1.msra.mxu0 0.0
    %324 = vmatprep.subr.mxu0 0.0
    %325 = vmatpush1.msra.mxu0 0.0
    %326 = vmatprep.subr.mxu0 0.0
    %327 = vmatpush1.msra.mxu0 0.0
    %328 = vmatprep.subr.mxu0 0.0
    %329 = vmatpush1.msra.mxu0 0.0
    %330 = vmatprep.subr.mxu0 0.0
    %331 = vmatpush1.msra.mxu0 0.0
    %332 = vmatprep.subr.mxu0 0.0
    %333 = vmatpush1.msra.mxu0 0.0
    %334 = vmatprep.subr.mxu0 0.0
    %335 = vmatpush1.msra.mxu0 0.0
    %336 = vmatprep.subr.mxu0 0.0
    %337 = vmatpush1.msra.mxu0 0.0
    %338 = vmatprep.subr.mxu0 0.0
    %339 = vmatpush1.msra.mxu0 0.0
    %340 = vmatprep.subr.mxu0 0.0
    %341 = vmatpush1.msra.mxu0 0.0
    %342 = vmatprep.subr.mxu0 0.0
    %343 = vmatpush1.msra.mxu0 0.0
    %344 = vmatprep.subr.mxu0 0.0
    %345 = vmatpush1.msra.mxu0 0.0
    %346 = vmatprep.mubr.f32.mxu0 0.0
    %347 = vmatmul.mubr.f32.gmra.mrb[0].mxu0 %v281
    %v348 = vpop.f32.mrb[0].mxu0
    %v349 = vadd.f32 0.0, %v348
    %v350 = vpop.f32.mrb[0].mxu0
    %351 = vdwg.mxu0
    %v352 = vmul.f32 %v278, 0.03125
    %v353 = vmul.f32 %v349, 0.03125
    %v354 = vmul.f32 %v352, %v352
    %v355 = vsub.f32 %v353, %v354
    %v356 = vmax.f32 %v355, 0.0
    %v357 = vsub.f32 %v210, %v352
    %v358 = vadd.f32 %v356, 1e-05
    %v359 = vrsqrt.pop %v358
    %v360 = vmul.f32 %v357, %v359
    %v361 = vlaneseq
    %v362 = vshrl.u32 %v361, 7
    %v363 = vsub.s32 0, %v362
    %v364 = vrot.slane %v87, %v363
    %v365 = vmul.f32 %v360, %v364
    %v366 = vlaneseq
    %v367 = vshrl.u32 %v366, 7
    %v368 = vsub.s32 0, %v367
    %v369 = vrot.slane %v88, %v368
    %v370 = vadd.f32 %v365, %v369
    %v371 = vmul.f32 %v370, 0.5
    %v372 = vmul.f32 %v370, 0.044715
    %v373 = vmul.f32 %v372, %v370
    %v374 = vmul.f32 %v373, %v370
    %v375 = vadd.f32 %v370, %v374
    %v376 = vmul.f32 %v375, 0.7978846
    %v377 = vtanh.pop %v376
    %v378 = vadd.f32 %v377, 1.0
    %v379 = vmul.f32 %v371, %v378
    %v380 = vpack.c.bf16 %v379, %v379
    %v381 = vld [vmem:[%s4] sm:$0xf]
    %v382 = vld [vmem:[%s4 + $0x4] sm:$0xf]
    %v383 = vld [vmem:[%s4 + $0x8] sm:$0xf]
    %v384 = vld [vmem:[%s4 + $0xc] sm:$0xf]
    %v385 = vld [vmem:[%s4 + $0x10] sm:$0xf]
    %v386 = vld [vmem:[%s4 + $0x14] sm:$0xf]
    %v387 = vld [vmem:[%s4 + $0x18] sm:$0xf]
    %v388 = vld [vmem:[%s4 + $0x1c] sm:$0xf]
    %v389 = vld [vmem:[%s4 + $0x20] sm:$0xf]
    %v390 = vld [vmem:[%s4 + $0x24] sm:$0xf]
    %v391 = vld [vmem:[%s4 + $0x28] sm:$0xf]
    %v392 = vld [vmem:[%s4 + $0x2c] sm:$0xf]
    %v393 = vld [vmem:[%s4 + $0x30] sm:$0xf]
    %v394 = vld [vmem:[%s4 + $0x34] sm:$0xf]
    %v395 = vld [vmem:[%s4 + $0x38] sm:$0xf]
    %v396 = vld [vmem:[%s4 + $0x3c] sm:$0xf]
    %v397 = vlaneseq
    %v398 = vshrl.u32 %v397, 7
    %v399 = vsub.s32 0, %v398
    %v400 = vrot.slane %v89, %v399
    %v417 = vunpack.c.l.b16 %v381
    %v418 = vunpack.c.l.b16 %v382
    %v419 = vunpack.c.l.b16 %v383
    %v420 = vunpack.c.l.b16 %v384
    %v421 = vunpack.c.l.b16 %v385
    %v422 = vunpack.c.l.b16 %v386
    %v423 = vunpack.c.l.b16 %v387
    %v424 = vunpack.c.l.b16 %v388
    %v425 = vunpack.c.l.b16 %v389
    %v426 = vunpack.c.l.b16 %v390
    %v427 = vunpack.c.l.b16 %v391
    %v428 = vunpack.c.l.b16 %v392
    %v429 = vunpack.c.l.b16 %v393
    %v430 = vunpack.c.l.b16 %v394
    %v431 = vunpack.c.l.b16 %v395
    %v432 = vunpack.c.l.b16 %v396
    %v433 = vpack.c.b16 %v418, %v417
    %v434 = vpack.c.b16 %v420, %v419
    %v435 = vpack.c.b16 %v422, %v421
    %v436 = vpack.c.b16 %v424, %v423
    %v437 = vpack.c.b16 %v426, %v425
    %v438 = vpack.c.b16 %v428, %v427
    %v439 = vpack.c.b16 %v430, %v429
    %v440 = vpack.c.b16 %v432, %v431
    %449 = vmatprep.subr.bf16.mxu0 0
    %450 = vmatpush1.bf16.msra.mxu0 %v433
    %451 = vmatprep.subr.bf16.mxu0 0
    %452 = vmatpush1.bf16.msra.mxu0 %v434
    %453 = vmatprep.subr.bf16.mxu0 0
    %454 = vmatpush1.bf16.msra.mxu0 %v435
    %455 = vmatprep.subr.bf16.mxu0 0
    %456 = vmatpush1.bf16.msra.mxu0 %v436
    %457 = vmatprep.subr.bf16.mxu0 0
    %458 = vmatpush1.bf16.msra.mxu0 %v437
    %459 = vmatprep.subr.bf16.mxu0 0
    %460 = vmatpush1.bf16.msra.mxu0 %v438
    %461 = vmatprep.subr.bf16.mxu0 0
    %462 = vmatpush1.bf16.msra.mxu0 %v439
    %463 = vmatprep.subr.bf16.mxu0 0
    %464 = vmatpush1.bf16.msra.mxu0 %v440
    %465 = vmatprep.subr.bf16.mxu0 0
    %466 = vmatpush1.bf16.msra.mxu0 0
    %467 = vmatprep.subr.bf16.mxu0 0
    %468 = vmatpush1.bf16.msra.mxu0 0
    %469 = vmatprep.subr.bf16.mxu0 0
    %470 = vmatpush1.bf16.msra.mxu0 0
    %471 = vmatprep.subr.bf16.mxu0 0
    %472 = vmatpush1.bf16.msra.mxu0 0
    %473 = vmatprep.subr.bf16.mxu0 0
    %474 = vmatpush1.bf16.msra.mxu0 0
    %475 = vmatprep.subr.bf16.mxu0 0
    %476 = vmatpush1.bf16.msra.mxu0 0
    %477 = vmatprep.subr.bf16.mxu0 0
    %478 = vmatpush1.bf16.msra.mxu0 0
    %479 = vmatprep.subr.bf16.mxu0 0
    %480 = vmatpush1.bf16.msra.mxu0 0
    %481 = vmatprep.mubr.bf16.mxu0 0
    %482 = vmatmul.mubr.bf16.gmra.mrb[0].mxu0 %v380
    %v483 = vpop.f32.mrb[0].mxu0
    %v484 = vadd.f32 %v400, %v483
    %v485 = vpop.f32.mrb[0].mxu0
    %v486 = vpop.f32.mrb[0].mxu0
    %v487 = vpop.f32.mrb[0].mxu0
    %488 = vdwg.mxu0
    %489 = vmatprep.subr.mxu0 0.0
    %490 = vmatpush1.msra.mxu0 %v70
    %491 = vmatprep.subr.mxu0 0.0
    %492 = vmatpush1.msra.mxu0 %v71
    %493 = vmatprep.subr.mxu0 0.0
    %494 = vmatpush1.msra.mxu0 %v72
    %495 = vmatprep.subr.mxu0 0.0
    %496 = vmatpush1.msra.mxu0 %v73
    %497 = vmatprep.subr.mxu0 0.0
    %498 = vmatpush1.msra.mxu0 %v74
    %499 = vmatprep.subr.mxu0 0.0
    %500 = vmatpush1.msra.mxu0 %v75
    %501 = vmatprep.subr.mxu0 0.0
    %502 = vmatpush1.msra.mxu0 %v76
    %503 = vmatprep.subr.mxu0 0.0
    %504 = vmatpush1.msra.mxu0 %v77
    %505 = vmatprep.subr.mxu0 0.0
    %506 = vmatpush1.msra.mxu0 %v78
    %507 = vmatprep.subr.mxu0 0.0
    %508 = vmatpush1.msra.mxu0 %v79
    %509 = vmatprep.subr.mxu0 0.0
    %510 = vmatpush1.msra.mxu0 %v80
    %511 = vmatprep.subr.mxu0 0.0
    %512 = vmatpush1.msra.mxu0 %v81
    %513 = vmatprep.subr.mxu0 0.0
    %514 = vmatpush1.msra.mxu0 %v82
    %515 = vmatprep.subr.mxu0 0.0
    %516 = vmatpush1.msra.mxu0 %v83
    %517 = vmatprep.subr.mxu0 0.0
    %518 = vmatpush1.msra.mxu0 %v84
    %519 = vmatprep.subr.mxu0 0.0
    %520 = vmatpush1.msra.mxu0 %v85
    %521 = vmatprep.subr.mxu0 0.0
    %522 = vmatpush1.msra.mxu0 0.0
    %523 = vmatprep.subr.mxu0 0.0
    %524 = vmatpush1.msra.mxu0 0.0
    %525 = vmatprep.subr.mxu0 0.0
    %526 = vmatpush1.msra.mxu0 0.0
    %527 = vmatprep.subr.mxu0 0.0
    %528 = vmatpush1.msra.mxu0 0.0
    %529 = vmatprep.subr.mxu0 0.0
    %530 = vmatpush1.msra.mxu0 0.0
    %531 = vmatprep.subr.mxu0 0.0
    %532 = vmatpush1.msra.mxu0 0.0
    %533 = vmatprep.subr.mxu0 0.0
    %534 = vmatpush1.msra.mxu0 0.0
    %535 = vmatprep.subr.mxu0 0.0
    %536 = vmatpush1.msra.mxu0 0.0
    %537 = vmatprep.subr.mxu0 0.0
    %538 = vmatpush1.msra.mxu0 0.0
    %539 = vmatprep.subr.mxu0 0.0
    %540 = vmatpush1.msra.mxu0 0.0
    %541 = vmatprep.subr.mxu0 0.0
    %542 = vmatpush1.msra.mxu0 0.0
    %543 = vmatprep.subr.mxu0 0.0
    %544 = vmatpush1.msra.mxu0 0.0
    %545 = vmatprep.subr.mxu0 0.0
    %546 = vmatpush1.msra.mxu0 0.0
    %547 = vmatprep.subr.mxu0 0.0
    %548 = vmatpush1.msra.mxu0 0.0
    %549 = vmatprep.subr.mxu0 0.0
    %550 = vmatpush1.msra.mxu0 0.0
    %551 = vmatprep.subr.mxu0 0.0
    %552 = vmatpush1.msra.mxu0 0.0
    %553 = vmatprep.mubr.f32.mxu0 0.0
    %554 = vmatmul.mubr.f32.gmra.mrb[0].mxu0 %v484
    %v555 = vpop.f32.mrb[0].mxu0
    %v556 = vadd.f32 0.0, %v555
    %v557 = vpop.f32.mrb[0].mxu0
    %558 = vdwg.mxu0
    %v559 = vmul.f32 %v484, %v484
    %560 = vmatprep.subr.mxu0 0.0
    %561 = vmatpush1.msra.mxu0 %v70
    %562 = vmatprep.subr.mxu0 0.0
    %563 = vmatpush1.msra.mxu0 %v71
    %564 = vmatprep.subr.mxu0 0.0
    %565 = vmatpush1.msra.mxu0 %v72
    %566 = vmatprep.subr.mxu0 0.0
    %567 = vmatpush1.msra.mxu0 %v73
    %568 = vmatprep.subr.mxu0 0.0
    %569 = vmatpush1.msra.mxu0 %v74
    %570 = vmatprep.subr.mxu0 0.0
    %571 = vmatpush1.msra.mxu0 %v75
    %572 = vmatprep.subr.mxu0 0.0
    %573 = vmatpush1.msra.mxu0 %v76
    %574 = vmatprep.subr.mxu0 0.0
    %575 = vmatpush1.msra.mxu0 %v77
    %576 = vmatprep.subr.mxu0 0.0
    %577 = vmatpush1.msra.mxu0 %v78
    %578 = vmatprep.subr.mxu0 0.0
    %579 = vmatpush1.msra.mxu0 %v79
    %580 = vmatprep.subr.mxu0 0.0
    %581 = vmatpush1.msra.mxu0 %v80
    %582 = vmatprep.subr.mxu0 0.0
    %583 = vmatpush1.msra.mxu0 %v81
    %584 = vmatprep.subr.mxu0 0.0
    %585 = vmatpush1.msra.mxu0 %v82
    %586 = vmatprep.subr.mxu0 0.0
    %587 = vmatpush1.msra.mxu0 %v83
    %588 = vmatprep.subr.mxu0 0.0
    %589 = vmatpush1.msra.mxu0 %v84
    %590 = vmatprep.subr.mxu0 0.0
    %591 = vmatpush1.msra.mxu0 %v85
    %592 = vmatprep.subr.mxu0 0.0
    %593 = vmatpush1.msra.mxu0 0.0
    %594 = vmatprep.subr.mxu0 0.0
    %595 = vmatpush1.msra.mxu0 0.0
    %596 = vmatprep.subr.mxu0 0.0
    %597 = vmatpush1.msra.mxu0 0.0
    %598 = vmatprep.subr.mxu0 0.0
    %599 = vmatpush1.msra.mxu0 0.0
    %600 = vmatprep.subr.mxu0 0.0
    %601 = vmatpush1.msra.mxu0 0.0
    %602 = vmatprep.subr.mxu0 0.0
    %603 = vmatpush1.msra.mxu0 0.0
    %604 = vmatprep.subr.mxu0 0.0
    %605 = vmatpush1.msra.mxu0 0.0
    %606 = vmatprep.subr.mxu0 0.0
    %607 = vmatpush1.msra.mxu0 0.0
    %608 = vmatprep.subr.mxu0 0.0
    %609 = vmatpush1.msra.mxu0 0.0
    %610 = vmatprep.subr.mxu0 0.0
    %611 = vmatpush1.msra.mxu0 0.0
    %612 = vmatprep.subr.mxu0 0.0
    %613 = vmatpush1.msra.mxu0 0.0
    %614 = vmatprep.subr.mxu0 0.0
    %615 = vmatpush1.msra.mxu0 0.0
    %616 = vmatprep.subr.mxu0 0.0
    %617 = vmatpush1.msra.mxu0 0.0
    %618 = vmatprep.subr.mxu0 0.0
    %619 = vmatpush1.msra.mxu0 0.0
    %620 = vmatprep.subr.mxu0 0.0
    %621 = vmatpush1.msra.mxu0 0.0
    %622 = vmatprep.subr.mxu0 0.0
    %623 = vmatpush1.msra.mxu0 0.0
    %624 = vmatprep.mubr.f32.mxu0 0.0
    %625 = vmatmul.mubr.f32.gmra.mrb[0].mxu0 %v559
    %v626 = vpop.f32.mrb[0].mxu0
    %v627 = vadd.f32 0.0, %v626
    %v628 = vpop.f32.mrb[0].mxu0
    %629 = vdwg.mxu0
    %v630 = vmul.f32 %v556, 0.03125
    %v631 = vmul.f32 %v627, 0.03125
    %v632 = vmul.f32 %v630, %v630
    %v633 = vsub.f32 %v631, %v632
    %v634 = vmax.f32 %v633, 0.0
    %v635 = vsub.f32 %v484, %v630
    %v636 = vadd.f32 %v634, 1e-05
    %v637 = vrsqrt.pop %v636
    %v638 = vmul.f32 %v635, %v637
    %v639 = vlaneseq
    %v640 = vshrl.u32 %v639, 7
    %v641 = vsub.s32 0, %v640
    %v642 = vrot.slane %v90, %v641
    %v643 = vmul.f32 %v638, %v642
    %v644 = vlaneseq
    %v645 = vshrl.u32 %v644, 7
    %v646 = vsub.s32 0, %v645
    %v647 = vrot.slane %v91, %v646
    %v648 = vadd.f32 %v643, %v647
    %v649 = vmul.f32 %v648, 0.5
    %v650 = vmul.f32 %v648, 0.044715
    %v651 = vmul.f32 %v650, %v648
    %v652 = vmul.f32 %v651, %v648
    %v653 = vadd.f32 %v648, %v652
    %v654 = vmul.f32 %v653, 0.7978846
    %v655 = vtanh.pop %v654
    %v656 = vadd.f32 %v655, 1.0
    %v657 = vmul.f32 %v649, %v656
    %v658 = vpack.c.bf16 %v657, %v657
    %v659 = vld [vmem:[%s5] sm:$0xf]
    %v660 = vld [vmem:[%s5 + $0x4] sm:$0xf]
    %v661 = vld [vmem:[%s5 + $0x8] sm:$0xf]
    %v662 = vld [vmem:[%s5 + $0xc] sm:$0xf]
    %v663 = vld [vmem:[%s5 + $0x10] sm:$0xf]
    %v664 = vld [vmem:[%s5 + $0x14] sm:$0xf]
    %v665 = vld [vmem:[%s5 + $0x18] sm:$0xf]
    %v666 = vld [vmem:[%s5 + $0x1c] sm:$0xf]
    %v667 = vld [vmem:[%s5 + $0x20] sm:$0xf]
    %v668 = vld [vmem:[%s5 + $0x24] sm:$0xf]
    %v669 = vld [vmem:[%s5 + $0x28] sm:$0xf]
    %v670 = vld [vmem:[%s5 + $0x2c] sm:$0xf]
    %v671 = vld [vmem:[%s5 + $0x30] sm:$0xf]
    %v672 = vld [vmem:[%s5 + $0x34] sm:$0xf]
    %v673 = vld [vmem:[%s5 + $0x38] sm:$0xf]
    %v674 = vld [vmem:[%s5 + $0x3c] sm:$0xf]
    %v675 = vld [vmem:[#allocation2] sm:$0x1]
    %v677 = vlaneseq
    %v678 = vshrl.u32 %v677, 7
    %v679 = vsub.s32 0, %v678
    %v680 = vrot.slane %v675, %v679
    %v698 = vunpack.c.l.b16 %v659
    %v699 = vunpack.c.l.b16 %v660
    %v700 = vunpack.c.l.b16 %v661
    %v701 = vunpack.c.l.b16 %v662
    %v702 = vunpack.c.l.b16 %v663
    %v703 = vunpack.c.l.b16 %v664
    %v704 = vunpack.c.l.b16 %v665
    %v705 = vunpack.c.l.b16 %v666
    %v706 = vunpack.c.l.b16 %v667
    %v707 = vunpack.c.l.b16 %v668
    %v708 = vunpack.c.l.b16 %v669
    %v709 = vunpack.c.l.b16 %v670
    %v710 = vunpack.c.l.b16 %v671
    %v711 = vunpack.c.l.b16 %v672
    %v712 = vunpack.c.l.b16 %v673
    %v713 = vunpack.c.l.b16 %v674
    %v714 = vpack.c.b16 %v699, %v698
    %v715 = vpack.c.b16 %v701, %v700
    %v716 = vpack.c.b16 %v703, %v702
    %v717 = vpack.c.b16 %v705, %v704
    %v718 = vpack.c.b16 %v707, %v706
    %v719 = vpack.c.b16 %v709, %v708
    %v720 = vpack.c.b16 %v711, %v710
    %v721 = vpack.c.b16 %v713, %v712
    %730 = vmatprep.subr.bf16.mxu0 0
    %731 = vmatpush1.bf16.msra.mxu0 %v714
    %732 = vmatprep.subr.bf16.mxu0 0
    %733 = vmatpush1.bf16.msra.mxu0 %v715
    %734 = vmatprep.subr.bf16.mxu0 0
    %735 = vmatpush1.bf16.msra.mxu0 %v716
    %736 = vmatprep.subr.bf16.mxu0 0
    %737 = vmatpush1.bf16.msra.mxu0 %v717
    %738 = vmatprep.subr.bf16.mxu0 0
    %739 = vmatpush1.bf16.msra.mxu0 %v718
    %740 = vmatprep.subr.bf16.mxu0 0
    %741 = vmatpush1.bf16.msra.mxu0 %v719
    %742 = vmatprep.subr.bf16.mxu0 0
    %743 = vmatpush1.bf16.msra.mxu0 %v720
    %744 = vmatprep.subr.bf16.mxu0 0
    %745 = vmatpush1.bf16.msra.mxu0 %v721
    %746 = vmatprep.subr.bf16.mxu0 0
    %747 = vmatpush1.bf16.msra.mxu0 0
    %748 = vmatprep.subr.bf16.mxu0 0
    %749 = vmatpush1.bf16.msra.mxu0 0
    %750 = vmatprep.subr.bf16.mxu0 0
    %751 = vmatpush1.bf16.msra.mxu0 0
    %752 = vmatprep.subr.bf16.mxu0 0
    %753 = vmatpush1.bf16.msra.mxu0 0
    %754 = vmatprep.subr.bf16.mxu0 0
    %755 = vmatpush1.bf16.msra.mxu0 0
    %756 = vmatprep.subr.bf16.mxu0 0
    %757 = vmatpush1.bf16.msra.mxu0 0
    %758 = vmatprep.subr.bf16.mxu0 0
    %759 = vmatpush1.bf16.msra.mxu0 0
    %760 = vmatprep.subr.bf16.mxu0 0
    %761 = vmatpush1.bf16.msra.mxu0 0
    %762 = vmatprep.mubr.bf16.mxu0 0
    %763 = vmatmul.mubr.bf16.gmra.mrb[0].mxu0 %v658
    %v764 = vpop.f32.mrb[0].mxu0
    %v765 = vadd.f32 %v680, %v764
    %v766 = vpop.f32.mrb[0].mxu0
    %v767 = vpop.f32.mrb[0].mxu0
    %v768 = vpop.f32.mrb[0].mxu0
    %769 = vdwg.mxu0
    %vm770 = vcmask 29696
    %771 = vst.msk [vmem:[%s9] sm:$0x3f] %vm770, %v765
    // Predicated region
    $region50: #{qfuncs_forward.1} parent=1 // pred_check
      _
    $region51: #{qfuncs_forward.1} parent=1 // pred_check_branch
      %773 = sbr.rel (0) target = $region53
    $region52: #{qfuncs_forward.1} parent=1 // pred_region
      _
    $region53: #{qfuncs_forward.1} parent=1 // pred_fallthru
      _
    // Predicated region
    $region54: #{qfuncs_forward.1} parent=1 // pred_check
      _
    $region55: #{qfuncs_forward.1} parent=1 // pred_check_branch
      %775 = sbr.rel (0) target = $region57
    $region56: #{qfuncs_forward.1} parent=1 // pred_region
      _
    $region57: #{qfuncs_forward.1} parent=1 // pred_fallthru
      _
    %776 = vsyncpa [#allocation3], 1
    %777 = vsyncpa [#allocation5], 1

</llo_original>
